<compile_context>
chip_gen: v7x
topology: tpu7x:2x2x1
jax: 0.10.0
libtpu: 0.0.40
codegen_flags: <defaults>
</compile_context>

<pallas_src>
import functools

import jax
import jax.numpy as jnp
from jax import lax
from jax.experimental import pallas as pl
from jax.experimental.pallas import tpu as pltpu

TK = 256          # K tile for the conv matmul (fills 256-wide MXU on v6e/v7x)
TILE_M = 512      # preferred M (lane) tile
NEG_SLOPE = 0.2   # LeakyReLU slope
EPS = 1e-5        # BatchNorm eps (PyTorch default)


def _round_up(x, m):
    return ((x + m - 1) // m) * m


# ---------------------------------------------------------------- kernels ---

def _conv_kernel(w_ref, x_ref, b_ref, o_ref, *, apply_lrelu):
    """o = W @ X (+ bias, optional LeakyReLU), accumulated in f32 directly in o_ref.

    Grid: (m tiles [parallel], k tiles [arbitrary]).  Blocks:
      w_ref: (Cp, TK) bf16, x_ref: (TK, tile_m) bf16, b_ref: (Cp, 1) f32,
      o_ref: (Cp, tile_m) f32 (same block for every k -> resident accumulator).
    """
    k = pl.program_id(1)

    @pl.when(k == 0)
    def _():
        o_ref[...] = jnp.zeros_like(o_ref)

    o_ref[...] += jnp.dot(w_ref[...], x_ref[...],
                          preferred_element_type=jnp.float32)

    @pl.when(k == pl.num_programs(1) - 1)
    def _():
        y = o_ref[...] + b_ref[...]
        if apply_lrelu:
            y = jnp.where(y >= 0, y, NEG_SLOPE * y)
        o_ref[...] = y


def _stats_kernel(x_ref, sum_ref, sq_ref, *, m_true, tile_m):
    """Per-channel sum and sum-of-squares over the (lane) M axis, tiled over M.

    Padded M columns (col >= m_true) are masked out so they do not pollute the stats.
    """
    m = pl.program_id(0)

    @pl.when(m == 0)
    def _():
        sum_ref[...] = jnp.zeros_like(sum_ref)
        sq_ref[...] = jnp.zeros_like(sq_ref)

    x = x_ref[...]
    col = m * tile_m + lax.broadcasted_iota(jnp.int32, x.shape, 1)
    x = jnp.where(col < m_true, x, 0.0)
    sum_ref[...] += jnp.sum(x, axis=1, keepdims=True)
    sq_ref[...] += jnp.sum(x * x, axis=1, keepdims=True)


def _affine_lrelu_kernel(x_ref, scale_ref, shift_ref, o_ref):
    """y = leaky_relu(x * scale + shift); scale/shift broadcast along lanes."""
    y = x_ref[...] * scale_ref[...] + shift_ref[...]
    o_ref[...] = jnp.where(y >= 0, y, NEG_SLOPE * y)


# ------------------------------------------------------------------- glue ---

def im2col_cnhw(x_cnhw, kh, kw, stride, pad):
    """Unfold CNHW input into a transposed (K, M) patch matrix.

    K = C*kh*kw ordered (c, i, j) -- matches w.reshape(C_out, C_in*kh*kw);
    M = N*Ho*Wo ordered (n, ho, wo).
    """
    C, N, H, W = x_cnhw.shape
    Ho = (H + 2 * pad - kh) // stride + 1
    Wo = (W + 2 * pad - kw) // stride + 1
    xp = jnp.pad(x_cnhw, ((0, 0), (0, 0), (pad, pad), (pad, pad)))
    taps = []
    for i in range(kh):
        for j in range(kw):
            taps.append(xp[:, :, i:i + stride * Ho:stride, j:j + stride * Wo:stride])
    cols = jnp.stack(taps, axis=1)                 # (C, kh*kw, N, Ho, Wo)
    cols = cols.reshape(C * kh * kw, N * Ho * Wo)  # (K, M)
    return cols, Ho, Wo


def conv2d_pallas(x_cnhw, w, b, stride, apply_lrelu):
    """Conv2d(k=4, padding=1) via transposed im2col matmul on the MXU (bf16 in, f32 acc)."""
    C_out, C_in, kh, kw = w.shape
    cols, Ho, Wo = im2col_cnhw(x_cnhw, kh, kw, stride, 1)
    K, M = cols.shape

    tk = min(TK, _round_up(K, 128))
    Kp = _round_up(K, tk)
    Mp = _round_up(M, 128)
    tile_m = TILE_M if Mp % TILE_M == 0 else (256 if Mp % 256 == 0 else 128)
    Cp = _round_up(C_out, 8)                       # avoid degenerate sublane dims

    cols = jnp.pad(cols, ((0, Kp - K), (0, Mp - M))).astype(jnp.bfloat16)
    w_mat = jnp.pad(w.reshape(C_out, K),
                    ((0, Cp - C_out), (0, Kp - K))).astype(jnp.bfloat16)
    b2 = jnp.pad(b, (0, Cp - C_out)).reshape(Cp, 1).astype(jnp.float32)

    y = pl.pallas_call(
        functools.partial(_conv_kernel, apply_lrelu=apply_lrelu),
        out_shape=jax.ShapeDtypeStruct((Cp, Mp), jnp.float32),
        grid=(Mp // tile_m, Kp // tk),
        in_specs=[
            pl.BlockSpec((Cp, tk), lambda m, k: (0, k)),       # weights
            pl.BlockSpec((tk, tile_m), lambda m, k: (k, m)),   # patches
            pl.BlockSpec((Cp, 1), lambda m, k: (0, 0)),        # bias
        ],
        out_specs=pl.BlockSpec((Cp, tile_m), lambda m, k: (0, m)),
        compiler_params=pltpu.CompilerParams(
            dimension_semantics=("parallel", "arbitrary")),
    )(w_mat, cols, b2)
    return y, Ho, Wo, M, tile_m


def batchnorm_lrelu_pallas(y_cm, gamma, beta, m_true, tile_m):
    """Training-mode BatchNorm2d (batch stats, biased var) + LeakyReLU(0.2) in (C, M) layout."""
    C, Mp = y_cm.shape
    s, ss = pl.pallas_call(
        functools.partial(_stats_kernel, m_true=m_true, tile_m=tile_m),
        out_shape=(jax.ShapeDtypeStruct((C, 1), jnp.float32),
                   jax.ShapeDtypeStruct((C, 1), jnp.float32)),
        grid=(Mp // tile_m,),
        in_specs=[pl.BlockSpec((C, tile_m), lambda m: (0, m))],
        out_specs=(pl.BlockSpec((C, 1), lambda m: (0, 0)),
                   pl.BlockSpec((C, 1), lambda m: (0, 0))),
        compiler_params=pltpu.CompilerParams(
            dimension_semantics=("arbitrary",)),
    )(y_cm)

    mean = s / m_true
    var = jnp.maximum(ss / m_true - mean * mean, 0.0)   # guard cancellation
    inv = lax.rsqrt(var + EPS)
    scale = gamma.reshape(C, 1).astype(jnp.float32) * inv
    shift = beta.reshape(C, 1).astype(jnp.float32) - mean * scale

    return pl.pallas_call(
        _affine_lrelu_kernel,
        out_shape=jax.ShapeDtypeStruct((C, Mp), jnp.float32),
        grid=(Mp // tile_m,),
        in_specs=[pl.BlockSpec((C, tile_m), lambda m: (0, m)),
                  pl.BlockSpec((C, 1), lambda m: (0, 0)),
                  pl.BlockSpec((C, 1), lambda m: (0, 0))],
        out_specs=pl.BlockSpec((C, tile_m), lambda m: (0, m)),
        compiler_params=pltpu.CompilerParams(
            dimension_semantics=("parallel",)),
    )(y_cm, scale, shift)


# ----------------------------------------------------------------- model ----

def build_params(key, input_nc=3, ndf=16, n_layers=3):
    """Deterministic synthetic parameters matching PatchGANDiscriminator.__init__."""
    cfg = [(input_nc, ndf, 2, False, True)]            # (Cin, Cout, stride, bn, lrelu)
    nf_mult = 1
    for n in range(1, n_layers):
        nf_prev, nf_mult = nf_mult, min(2 ** n, 8)
        cfg.append((ndf * nf_prev, ndf * nf_mult, 2, True, True))
    nf_prev, nf_mult = nf_mult, min(2 ** n_layers, 8)
    cfg.append((ndf * nf_prev, ndf * nf_mult, 1, True, True))
    cfg.append((ndf * nf_mult, 1, 1, False, False))

    params = []
    for (cin, cout, stride, bn, act) in cfg:
        key, kw_, kb_, kg_, kbt_ = jax.random.split(key, 5)
        p = {
            "w": 0.1 * jax.random.normal(kw_, (cout, cin, 4, 4), jnp.float32),
            "b": 0.01 * jax.random.normal(kb_, (cout,), jnp.float32),
            "stride": stride, "bn": bn, "act": act,
        }
        if bn:
            p["gamma"] = 1.0 + 0.1 * jax.random.normal(kg_, (cout,), jnp.float32)
            p["beta"] = 0.1 * jax.random.normal(kbt_, (cout,), jnp.float32)
        params.append(p)
    return params


def patchgan_forward(x_nchw, params):
    N = x_nchw.shape[0]
    x = jnp.transpose(x_nchw, (1, 0, 2, 3))            # CNHW flat layout between layers
    for p in params:
        C_out = p["w"].shape[0]
        y, Ho, Wo, M, tile_m = conv2d_pallas(
            x, p["w"], p["b"], p["stride"],
            apply_lrelu=(p["act"] and not p["bn"]),
        )
        y = y[:C_out]                                   # drop sublane padding (no-op except last layer)
        if p["bn"]:
            y = batchnorm_lrelu_pallas(y, p["gamma"], p["beta"], M, tile_m)
        x = y[:, :M].reshape(C_out, N, Ho, Wo)          # plain reshape, no transpose
    return jnp.transpose(x, (1, 0, 2, 3))               # back to NCHW


def ref_forward(x_nchw, params):
    """Pure-JAX reference with matching numerics (bf16 MXU operands, f32 accumulation)."""
    x = x_nchw
    for p in params:
        y = lax.conv_general_dilated(
            x.astype(jnp.bfloat16), p["w"].astype(jnp.bfloat16),
            (p["stride"], p["stride"]), ((1, 1), (1, 1)),
            dimension_numbers=("NCHW", "OIHW", "NCHW"),
            preferred_element_type=jnp.float32,
        ) + p["b"][None, :, None, None]
        if p["bn"]:
            mean = jnp.mean(y, axis=(0, 2, 3), keepdims=True)
            var = jnp.var(y, axis=(0, 2, 3), keepdims=True)
            y = (y - mean) * lax.rsqrt(var + EPS)
            y = y * p["gamma"][None, :, None, None] + p["beta"][None, :, None, None]
            y = jnp.where(y >= 0, y, NEG_SLOPE * y)
        elif p["act"]:
            y = jnp.where(y >= 0, y, NEG_SLOPE * y)
        x = y
    return x


if __name__ == "__main__":
    key = jax.random.PRNGKey(0)
    key, kx = jax.random.split(key)

    # Small but valid config: 32x32 spatial so all five k=4 convs produce >=1 output.
    N, input_nc, H, W = 2, 3, 32, 32
    ndf, n_layers = 16, 3

    x = jax.random.normal(kx, (N, input_nc, H, W), jnp.float32)
    params = build_params(key, input_nc=input_nc, ndf=ndf, n_layers=n_layers)

    out = jax.block_until_ready(patchgan_forward(x, params))
    ref = jax.block_until_ready(ref_forward(x, params))

    assert out.shape == ref.shape == (N, 1, 2, 2), (out.shape, ref.shape)
    err = float(jnp.max(jnp.abs(out - ref)))
    assert err < 5e-3, f"max abs error too large: {err}"

    print("KERNEL_OK")
</pallas_src>

<mosaic_0001>
module attributes {stable_mosaic.version = 11 : i64} {
  func.func @_conv_kernel(%arg0: i32, %arg1: i32, %arg2: memref<16x128xbf16, #tpu.memory_space<vmem>>, %arg3: memref<128x512xbf16, #tpu.memory_space<vmem>>, %arg4: memref<16x1xf32, #tpu.memory_space<vmem>>, %arg5: memref<16x512xf32, #tpu.memory_space<vmem>>) attributes {dimension_semantics = [#tpu.dimension_semantics<parallel>, #tpu.dimension_semantics<arbitrary>], iteration_bounds = array<i64: 1, 1>, scalar_prefetch = 0 : i64, scratch_operands = 0 : i64, tpu.core_type = #tpu.core_type<tc>, window_params = [{transform_indices = @transform_0, window_bounds = array<i64: 16, 128>}, {transform_indices = @transform_1, window_bounds = array<i64: 128, 512>}, {pipeline_mode = #tpu.pipeline_mode<synchronous>, transform_indices = @transform_2, window_bounds = array<i64: 16, 1>}, {transform_indices = @transform_3, window_bounds = array<i64: 16, 512>}]} {
    %c0_i32 = arith.constant 0 : i32
    %0 = arith.cmpi eq, %arg1, %c0_i32 : i32
    %1 = arith.extui %0 : i1 to i32
    %c0_i32_0 = arith.constant 0 : i32
    %2 = arith.cmpi ne, %1, %c0_i32_0 : i32
    scf.if %2 {
      %cst_10 = arith.constant 0.000000e+00 : f32
      %12 = vector.broadcast %cst_10 : f32 to vector<16x512xf32>
      %c0_11 = arith.constant 0 : index
      %c0_12 = arith.constant 0 : index
      %13 = vector.load %arg5[%c0_11, %c0_12] : memref<16x512xf32, #tpu.memory_space<vmem>>, vector<16x512xf32>
      tpu.vector_store %arg5[%c0_11, %c0_12], %12 {strides = array<i32>} : memref<16x512xf32, #tpu.memory_space<vmem>>, vector<16x512xf32>,
    } else {
    }
    %c0 = arith.constant 0 : index
    %c0_1 = arith.constant 0 : index
    %3 = vector.load %arg5[%c0, %c0_1] : memref<16x512xf32, #tpu.memory_space<vmem>>, vector<16x512xf32>
    %c0_2 = arith.constant 0 : index
    %c0_3 = arith.constant 0 : index
    %4 = vector.load %arg2[%c0_2, %c0_3] : memref<16x128xbf16, #tpu.memory_space<vmem>>, vector<16x128xbf16>
    %c0_4 = arith.constant 0 : index
    %c0_5 = arith.constant 0 : index
    %5 = vector.load %arg3[%c0_4, %c0_5] : memref<128x512xbf16, #tpu.memory_space<vmem>>, vector<128x512xbf16>
    %cst = arith.constant dense<0.000000e+00> : vector<16x512xf32>
    %6 = tpu.matmul %4, %5, %cst {dimension_numbers = #tpu.dot_dimension_numbers<[1], [0], [0], [1], [0, 0, 1, 1], [], []>} : vector<16x128xbf16>, vector<128x512xbf16>, vector<16x512xf32> -> vector<16x512xf32>
    %7 = arith.addf %3, %6 : vector<16x512xf32>
    %c0_6 = arith.constant 0 : index
    %c0_7 = arith.constant 0 : index
    %8 = vector.load %arg5[%c0_6, %c0_7] : memref<16x512xf32, #tpu.memory_space<vmem>>, vector<16x512xf32>
    tpu.vector_store %arg5[%c0_6, %c0_7], %7 {strides = array<i32>} : memref<16x512xf32, #tpu.memory_space<vmem>>, vector<16x512xf32>,
    %c0_i32_8 = arith.constant 0 : i32
    %9 = arith.cmpi eq, %arg1, %c0_i32_8 : i32
    %10 = arith.extui %9 : i1 to i32
    %c0_i32_9 = arith.constant 0 : i32
    %11 = arith.cmpi ne, %10, %c0_i32_9 : i32
    scf.if %11 {
      %c0_10 = arith.constant 0 : index
      %c0_11 = arith.constant 0 : index
      %12 = vector.load %arg5[%c0_10, %c0_11] : memref<16x512xf32, #tpu.memory_space<vmem>>, vector<16x512xf32>
      %c0_12 = arith.constant 0 : index
      %c0_13 = arith.constant 0 : index
      %13 = vector.load %arg4[%c0_12, %c0_13] : memref<16x1xf32, #tpu.memory_space<vmem>>, vector<16x1xf32>
      %14 = vector.broadcast %13 : vector<16x1xf32> to vector<16x512xf32>
      %15 = arith.addf %12, %14 : vector<16x512xf32>
      %cst_14 = arith.constant 0.000000e+00 : f32
      %16 = vector.broadcast %cst_14 : f32 to vector<16x512xf32>
      %17 = arith.cmpf oge, %15, %16 : vector<16x512xf32>
      %cst_15 = arith.constant 2.000000e-01 : f32
      %18 = vector.broadcast %cst_15 : f32 to vector<16x512xf32>
      %19 = arith.mulf %18, %15 : vector<16x512xf32>
      %20 = arith.select %17, %15, %19 : vector<16x512xi1>, vector<16x512xf32>
      %c0_16 = arith.constant 0 : index
      %c0_17 = arith.constant 0 : index
      %21 = vector.load %arg5[%c0_16, %c0_17] : memref<16x512xf32, #tpu.memory_space<vmem>>, vector<16x512xf32>
      tpu.vector_store %arg5[%c0_16, %c0_17], %20 {strides = array<i32>} : memref<16x512xf32, #tpu.memory_space<vmem>>, vector<16x512xf32>,
    } else {
    }
    return
  }
  func.func @transform_0(%arg0: i32, %arg1: i32) -> (i32, i32) {
    %c0_i32 = arith.constant 0 : i32
    %c0_i32_0 = arith.constant 0 : i32
    return %c0_i32, %arg1 : i32, i32
  }
  func.func @transform_1(%arg0: i32, %arg1: i32) -> (i32, i32) {
    %c0_i32 = arith.constant 0 : i32
    return %arg1, %arg0 : i32, i32
  }
  func.func @transform_2(%arg0: i32, %arg1: i32) -> (i32, i32) {
    %c0_i32 = arith.constant 0 : i32
    %c0_i32_0 = arith.constant 0 : i32
    %c0_i32_1 = arith.constant 0 : i32
    return %c0_i32, %c0_i32_0 : i32, i32
  }
  func.func @transform_3(%arg0: i32, %arg1: i32) -> (i32, i32) {
    %c0_i32 = arith.constant 0 : i32
    %c0_i32_0 = arith.constant 0 : i32
    return %c0_i32, %arg0 : i32, i32
  }
}

</mosaic_0001>

<llo_original>
// kernel: tpu_custom_call.1
$region0: #{tpu_custom_call.1}
  #allocation0 [shape = 'u32[]', space=smem, size = 0x4, offset = 0x4, fixed_abs, tag = 'smem constant byte address 0x4 - core index']
  #allocation1 [shape = 'u32[144,128]{1,0:T(1,128)}', space=vmem, size = 0x12000, scoped, tag = 'internal scratch']
  %s0 = inlined_call_operand.vmem [shape: bf16[16,128], index: 0, kind: input, shape index: {}]
  %s1 = inlined_call_operand.hbm [shape: bf16[128,512], index: 1, kind: input, shape index: {}]
  %s2 = inlined_call_operand.vmem [shape: f32[16,1], index: 2, kind: input, shape index: {}]
  %s3 = inlined_call_operand.hbm [shape: f32[16,512], index: 3, kind: output, shape index: {}]
  %s4 = sld [smem:[#allocation0]]
  $region34: #{tpu_custom_call.1} parent=0
    _
  %s6 = ssub.s32 1, %s4
  %s7 = scalar_select 0, %s6, %s4
  $region1: #{tpu_custom_call.1} parent=0
    #allocation2 [shape = 'u8[131072]{0}', space=vmem, size = 0x20000, scoped, tag = 'input window, operand 1, single buffered']
    #allocation3 [shape = 's32[1]{0}', space=sflag, size = 0x4, scoped, tag = 'scoped memory for tpu_custom_call.1']
    #allocation4 [shape = 's32[1]{0}', space=sflag, size = 0x4, scoped, tag = 'scoped memory for tpu_custom_call.1']
    #allocation5 [shape = 'u8[32768]{0}', space=vmem, size = 0x8000, scoped, tag = 'output window, operand 0, single buffered']
    %8 = vsyncpa [#allocation3], 0
    %9 = vsyncpa [#allocation4], 0
    // Predicated region
    $region2: #{tpu_custom_call.1} parent=1 // pred_check
      _
    $region3: #{tpu_custom_call.1} parent=1 // pred_check_branch
      %11 = sbr.rel (0) target = $region5
    $region4: #{tpu_custom_call.1} parent=1 // pred_region
      _
    $region5: #{tpu_custom_call.1} parent=1 // pred_fallthru
      _
    // Predicated region
    $region6: #{tpu_custom_call.1} parent=1 // pred_check
      _
    $region7: #{tpu_custom_call.1} parent=1 // pred_check_branch
      %13 = sbr.rel (0) target = $region9
    $region8: #{tpu_custom_call.1} parent=1 // pred_region
      %s15 = ssub.s32 4096, 4096
      %16 = vsyncadd [#allocation3], %s15
      %s17 = sshll.u32 [#allocation2], 4
      %s18 = int_to_ptr.vmem [resolvable:$true] %s17
      %23 = dma.hbm_to_vmem [thread:$0]  %s1, 4096, %s18, [#allocation3], 256, 256, 16
    $region9: #{tpu_custom_call.1} parent=1 // pred_fallthru
      _
    // Predicated region
    $region10: #{tpu_custom_call.1} parent=1 // pred_check
      _
    $region11: #{tpu_custom_call.1} parent=1 // pred_check_branch
      %25 = sbr.rel (0) target = $region13
    $region12: #{tpu_custom_call.1} parent=1 // pred_region
      _
    $region13: #{tpu_custom_call.1} parent=1 // pred_fallthru
      _
    // Predicated region
    $region14: #{tpu_custom_call.1} parent=1 // pred_check
      _
    $region15: #{tpu_custom_call.1} parent=1 // pred_check_branch
      %27 = sbr.rel (0) target = $region17
    $region16: #{tpu_custom_call.1} parent=1 // pred_region
      %28 = dma.done [#allocation3], 4096
    $region17: #{tpu_custom_call.1} parent=1 // pred_fallthru
      _
    %p30 = scmp.eq.s32.totalorder 0, 0
    // Predicated region
    $region18: #{tpu_custom_call.1} parent=1 // pred_check
      %p31 = pneg %p30
    $region19: #{tpu_custom_call.1} parent=1 // pred_check_branch
      %33 = sbr.rel (%p31) target = $region21
    $region20: #{tpu_custom_call.1} parent=1 // pred_region
      %34 = vst [vmem:[#allocation5] sm:$0xff] 0.0
      %35 = vst [vmem:[#allocation5 + $0x8] sm:$0xff] 0.0
      %36 = vst [vmem:[#allocation5 + $0x10] sm:$0xff] 0.0
      %37 = vst [vmem:[#allocation5 + $0x18] sm:$0xff] 0.0
      %38 = vst [vmem:[#allocation5 + $0x20] sm:$0xff] 0.0
      %39 = vst [vmem:[#allocation5 + $0x28] sm:$0xff] 0.0
      %40 = vst [vmem:[#allocation5 + $0x30] sm:$0xff] 0.0
      %41 = vst [vmem:[#allocation5 + $0x38] sm:$0xff] 0.0
    $region21: #{tpu_custom_call.1} parent=1 // pred_fallthru
      _
    %v42 = vld [vmem:[#allocation5] sm:$0xff]
    %v43 = vld [vmem:[#allocation5 + $0x8] sm:$0xff]
    %v44 = vld [vmem:[#allocation5 + $0x10] sm:$0xff]
    %v45 = vld [vmem:[#allocation5 + $0x18] sm:$0xff]
    %v46 = vld [vmem:[#allocation5 + $0x20] sm:$0xff]
    %v47 = vld [vmem:[#allocation5 + $0x28] sm:$0xff]
    %v48 = vld [vmem:[#allocation5 + $0x30] sm:$0xff]
    %v49 = vld [vmem:[#allocation5 + $0x38] sm:$0xff]
    %v50 = vld [vmem:[%s0] sm:$0xf]
    %v51 = vld [vmem:[%s0 + $0x4] sm:$0xf]
    %v52 = vld [vmem:[#allocation2] sm:$0xff]
    %v53 = vld [vmem:[#allocation2 + $0x8] sm:$0xff]
    %v54 = vld [vmem:[#allocation2 + $0x10] sm:$0xff]
    %v55 = vld [vmem:[#allocation2 + $0x18] sm:$0xff]
    %v56 = vld [vmem:[#allocation2 + $0x20] sm:$0xff]
    %v57 = vld [vmem:[#allocation2 + $0x28] sm:$0xff]
    %v58 = vld [vmem:[#allocation2 + $0x30] sm:$0xff]
    %v59 = vld [vmem:[#allocation2 + $0x38] sm:$0xff]
    %v60 = vld [vmem:[#allocation2 + $0x40] sm:$0xff]
    %v61 = vld [vmem:[#allocation2 + $0x48] sm:$0xff]
    %v62 = vld [vmem:[#allocation2 + $0x50] sm:$0xff]
    %v63 = vld [vmem:[#allocation2 + $0x58] sm:$0xff]
    %v64 = vld [vmem:[#allocation2 + $0x60] sm:$0xff]
    %v65 = vld [vmem:[#allocation2 + $0x68] sm:$0xff]
    %v66 = vld [vmem:[#allocation2 + $0x70] sm:$0xff]
    %v67 = vld [vmem:[#allocation2 + $0x78] sm:$0xff]
    %v68 = vld [vmem:[#allocation2 + $0x80] sm:$0xff]
    %v69 = vld [vmem:[#allocation2 + $0x88] sm:$0xff]
    %v70 = vld [vmem:[#allocation2 + $0x90] sm:$0xff]
    %v71 = vld [vmem:[#allocation2 + $0x98] sm:$0xff]
    %v72 = vld [vmem:[#allocation2 + $0xa0] sm:$0xff]
    %v73 = vld [vmem:[#allocation2 + $0xa8] sm:$0xff]
    %v74 = vld [vmem:[#allocation2 + $0xb0] sm:$0xff]
    %v75 = vld [vmem:[#allocation2 + $0xb8] sm:$0xff]
    %v76 = vld [vmem:[#allocation2 + $0xc0] sm:$0xff]
    %v77 = vld [vmem:[#allocation2 + $0xc8] sm:$0xff]
    %v78 = vld [vmem:[#allocation2 + $0xd0] sm:$0xff]
    %v79 = vld [vmem:[#allocation2 + $0xd8] sm:$0xff]
    %v80 = vld [vmem:[#allocation2 + $0xe0] sm:$0xff]
    %v81 = vld [vmem:[#allocation2 + $0xe8] sm:$0xff]
    %v82 = vld [vmem:[#allocation2 + $0xf0] sm:$0xff]
    %v83 = vld [vmem:[#allocation2 + $0xf8] sm:$0xff]
    %v86 = vunpack.c.l.b16 %v50
    %v87 = vunpack.c.l.b16 %v51
    %v88 = vpack.c.b16 %v87, %v86
    %v122 = vunpack.c.l.b16 %v52
    %v123 = vunpack.c.h.b16 %v52
    %v124 = vunpack.c.l.b16 %v53
    %v125 = vunpack.c.h.b16 %v53
    %v126 = vunpack.c.l.b16 %v54
    %v127 = vunpack.c.h.b16 %v54
    %v128 = vunpack.c.l.b16 %v55
    %v129 = vunpack.c.h.b16 %v55
    %v130 = vunpack.c.l.b16 %v56
    %v131 = vunpack.c.h.b16 %v56
    %v132 = vunpack.c.l.b16 %v57
    %v133 = vunpack.c.h.b16 %v57
    %v134 = vunpack.c.l.b16 %v58
    %v135 = vunpack.c.h.b16 %v58
    %v136 = vunpack.c.l.b16 %v59
    %v137 = vunpack.c.h.b16 %v59
    %v138 = vunpack.c.l.b16 %v60
    %v139 = vunpack.c.h.b16 %v60
    %v140 = vunpack.c.l.b16 %v61
    %v141 = vunpack.c.h.b16 %v61
    %v142 = vunpack.c.l.b16 %v62
    %v143 = vunpack.c.h.b16 %v62
    %v144 = vunpack.c.l.b16 %v63
    %v145 = vunpack.c.h.b16 %v63
    %v146 = vunpack.c.l.b16 %v64
    %v147 = vunpack.c.h.b16 %v64
    %v148 = vunpack.c.l.b16 %v65
    %v149 = vunpack.c.h.b16 %v65
    %v150 = vunpack.c.l.b16 %v66
    %v151 = vunpack.c.h.b16 %v66
    %v152 = vunpack.c.l.b16 %v67
    %v153 = vunpack.c.h.b16 %v67
    %v154 = vunpack.c.l.b16 %v68
    %v155 = vunpack.c.h.b16 %v68
    %v156 = vunpack.c.l.b16 %v69
    %v157 = vunpack.c.h.b16 %v69
    %v158 = vunpack.c.l.b16 %v70
    %v159 = vunpack.c.h.b16 %v70
    %v160 = vunpack.c.l.b16 %v71
    %v161 = vunpack.c.h.b16 %v71
    %v162 = vunpack.c.l.b16 %v72
    %v163 = vunpack.c.h.b16 %v72
    %v164 = vunpack.c.l.b16 %v73
    %v165 = vunpack.c.h.b16 %v73
    %v166 = vunpack.c.l.b16 %v74
    %v167 = vunpack.c.h.b16 %v74
    %v168 = vunpack.c.l.b16 %v75
    %v169 = vunpack.c.h.b16 %v75
    %v170 = vunpack.c.l.b16 %v76
    %v171 = vunpack.c.h.b16 %v76
    %v172 = vunpack.c.l.b16 %v77
    %v173 = vunpack.c.h.b16 %v77
    %v174 = vunpack.c.l.b16 %v78
    %v175 = vunpack.c.h.b16 %v78
    %v176 = vunpack.c.l.b16 %v79
    %v177 = vunpack.c.h.b16 %v79
    %v178 = vunpack.c.l.b16 %v80
    %v179 = vunpack.c.h.b16 %v80
    %v180 = vunpack.c.l.b16 %v81
    %v181 = vunpack.c.h.b16 %v81
    %v182 = vunpack.c.l.b16 %v82
    %v183 = vunpack.c.h.b16 %v82
    %v184 = vunpack.c.l.b16 %v83
    %v185 = vunpack.c.h.b16 %v83
    %v186 = vpack.c.b16 %v126, %v122
    %v187 = vpack.c.b16 %v127, %v123
    %v188 = vpack.c.b16 %v128, %v124
    %v189 = vpack.c.b16 %v129, %v125
    %v190 = vpack.c.b16 %v134, %v130
    %v191 = vpack.c.b16 %v135, %v131
    %v192 = vpack.c.b16 %v136, %v132
    %v193 = vpack.c.b16 %v137, %v133
    %v194 = vpack.c.b16 %v142, %v138
    %v195 = vpack.c.b16 %v143, %v139
    %v196 = vpack.c.b16 %v144, %v140
    %v197 = vpack.c.b16 %v145, %v141
    %v198 = vpack.c.b16 %v150, %v146
    %v199 = vpack.c.b16 %v151, %v147
    %v200 = vpack.c.b16 %v152, %v148
    %v201 = vpack.c.b16 %v153, %v149
    %v202 = vpack.c.b16 %v158, %v154
    %v203 = vpack.c.b16 %v159, %v155
    %v204 = vpack.c.b16 %v160, %v156
    %v205 = vpack.c.b16 %v161, %v157
    %v206 = vpack.c.b16 %v166, %v162
    %v207 = vpack.c.b16 %v167, %v163
    %v208 = vpack.c.b16 %v168, %v164
    %v209 = vpack.c.b16 %v169, %v165
    %v210 = vpack.c.b16 %v174, %v170
    %v211 = vpack.c.b16 %v175, %v171
    %v212 = vpack.c.b16 %v176, %v172
    %v213 = vpack.c.b16 %v177, %v173
    %v214 = vpack.c.b16 %v182, %v178
    %v215 = vpack.c.b16 %v183, %v179
    %v216 = vpack.c.b16 %v184, %v180
    %v217 = vpack.c.b16 %v185, %v181
    %250 = vmatprep.subr.bf16.mxu0 %v187
    %251 = vmatpush1.bf16.msra.mxu0 %v186
    %252 = vmatprep.subr.bf16.mxu0 %v191
    %253 = vmatpush1.bf16.msra.mxu0 %v190
    %254 = vmatprep.subr.bf16.mxu0 %v195
    %255 = vmatpush1.bf16.msra.mxu0 %v194
    %256 = vmatprep.subr.bf16.mxu0 %v199
    %257 = vmatpush1.bf16.msra.mxu0 %v198
    %258 = vmatprep.subr.bf16.mxu0 %v203
    %259 = vmatpush1.bf16.msra.mxu0 %v202
    %260 = vmatprep.subr.bf16.mxu0 %v207
    %261 = vmatpush1.bf16.msra.mxu0 %v206
    %262 = vmatprep.subr.bf16.mxu0 %v211
    %263 = vmatpush1.bf16.msra.mxu0 %v210
    %264 = vmatprep.subr.bf16.mxu0 %v215
    %265 = vmatpush1.bf16.msra.mxu0 %v214
    %266 = vmatprep.subr.bf16.mxu0 0
    %267 = vmatpush1.bf16.msra.mxu0 0
    %268 = vmatprep.subr.bf16.mxu0 0
    %269 = vmatpush1.bf16.msra.mxu0 0
    %270 = vmatprep.subr.bf16.mxu0 0
    %271 = vmatpush1.bf16.msra.mxu0 0
    %272 = vmatprep.subr.bf16.mxu0 0
    %273 = vmatpush1.bf16.msra.mxu0 0
    %274 = vmatprep.subr.bf16.mxu0 0
    %275 = vmatpush1.bf16.msra.mxu0 0
    %276 = vmatprep.subr.bf16.mxu0 0
    %277 = vmatpush1.bf16.msra.mxu0 0
    %278 = vmatprep.subr.bf16.mxu0 0
    %279 = vmatpush1.bf16.msra.mxu0 0
    %280 = vmatprep.subr.bf16.mxu0 0
    %281 = vmatpush1.bf16.msra.mxu0 0
    %282 = vmatprep.mubr.bf16.mxu0 0
    %283 = vmatmul.mubr.bf16.gmra.mrb[0].mxu0 %v88
    %v284 = vpop.f32.mrb[0].mxu0
    %v285 = vadd.f32 0.0, %v284
    %v286 = vpop.f32.mrb[0].mxu0
    %v287 = vadd.f32 0.0, %v286
    %v288 = vpop.f32.mrb[0].mxu0
    %v289 = vadd.f32 0.0, %v288
    %v290 = vpop.f32.mrb[0].mxu0
    %v291 = vadd.f32 0.0, %v290
    %292 = vdwg.mxu0
    %293 = vmatprep.subr.bf16.mxu0 %v189
    %294 = vmatpush1.bf16.msra.mxu0 %v188
    %295 = vmatprep.subr.bf16.mxu0 %v193
    %296 = vmatpush1.bf16.msra.mxu0 %v192
    %297 = vmatprep.subr.bf16.mxu0 %v197
    %298 = vmatpush1.bf16.msra.mxu0 %v196
    %299 = vmatprep.subr.bf16.mxu0 %v201
    %300 = vmatpush1.bf16.msra.mxu0 %v200
    %301 = vmatprep.subr.bf16.mxu0 %v205
    %302 = vmatpush1.bf16.msra.mxu0 %v204
    %303 = vmatprep.subr.bf16.mxu0 %v209
    %304 = vmatpush1.bf16.msra.mxu0 %v208
    %305 = vmatprep.subr.bf16.mxu0 %v213
    %306 = vmatpush1.bf16.msra.mxu0 %v212
    %307 = vmatprep.subr.bf16.mxu0 %v217
    %308 = vmatpush1.bf16.msra.mxu0 %v216
    %309 = vmatprep.subr.bf16.mxu0 0
    %310 = vmatpush1.bf16.msra.mxu0 0
    %311 = vmatprep.subr.bf16.mxu0 0
    %312 = vmatpush1.bf16.msra.mxu0 0
    %313 = vmatprep.subr.bf16.mxu0 0
    %314 = vmatpush1.bf16.msra.mxu0 0
    %315 = vmatprep.subr.bf16.mxu0 0
    %316 = vmatpush1.bf16.msra.mxu0 0
    %317 = vmatprep.subr.bf16.mxu0 0
    %318 = vmatpush1.bf16.msra.mxu0 0
    %319 = vmatprep.subr.bf16.mxu0 0
    %320 = vmatpush1.bf16.msra.mxu0 0
    %321 = vmatprep.subr.bf16.mxu0 0
    %322 = vmatpush1.bf16.msra.mxu0 0
    %323 = vmatprep.subr.bf16.mxu0 0
    %324 = vmatpush1.bf16.msra.mxu0 0
    %325 = vmatprep.mubr.bf16.mxu0 0
    %326 = vmatmul.mubr.bf16.gmra.mrb[0].mxu0 %v88
    %v327 = vpop.f32.mrb[0].mxu0
    %v328 = vadd.f32 0.0, %v327
    %v329 = vpop.f32.mrb[0].mxu0
    %v330 = vadd.f32 0.0, %v329
    %v331 = vpop.f32.mrb[0].mxu0
    %v332 = vadd.f32 0.0, %v331
    %v333 = vpop.f32.mrb[0].mxu0
    %v334 = vadd.f32 0.0, %v333
    %335 = vdwg.mxu0
    %v336 = vadd.f32 %v42, %v285
    %v337 = vadd.f32 %v43, %v287
    %v338 = vadd.f32 %v44, %v328
    %v339 = vadd.f32 %v45, %v330
    %v340 = vadd.f32 %v46, %v289
    %v341 = vadd.f32 %v47, %v291
    %v342 = vadd.f32 %v48, %v332
    %v343 = vadd.f32 %v49, %v334
    %344 = vst [vmem:[#allocation5] sm:$0xff] %v336
    %345 = vst [vmem:[#allocation5 + $0x8] sm:$0xff] %v337
    %346 = vst [vmem:[#allocation5 + $0x10] sm:$0xff] %v338
    %347 = vst [vmem:[#allocation5 + $0x18] sm:$0xff] %v339
    %348 = vst [vmem:[#allocation5 + $0x20] sm:$0xff] %v340
    %349 = vst [vmem:[#allocation5 + $0x28] sm:$0xff] %v341
    %350 = vst [vmem:[#allocation5 + $0x30] sm:$0xff] %v342
    %351 = vst [vmem:[#allocation5 + $0x38] sm:$0xff] %v343
    // Predicated region
    $region22: #{tpu_custom_call.1} parent=1 // pred_check
      %p352 = pneg %p30
    $region23: #{tpu_custom_call.1} parent=1 // pred_check_branch
      %354 = sbr.rel (%p352) target = $region25
    $region24: #{tpu_custom_call.1} parent=1 // pred_region
      %v355 = vld [vmem:[#allocation5] sm:$0xff]
      %v356 = vld [vmem:[#allocation5 + $0x8] sm:$0xff]
      %v357 = vld [vmem:[#allocation5 + $0x10] sm:$0xff]
      %v358 = vld [vmem:[#allocation5 + $0x18] sm:$0xff]
      %v359 = vld [vmem:[#allocation5 + $0x20] sm:$0xff]
      %v360 = vld [vmem:[#allocation5 + $0x28] sm:$0xff]
      %v361 = vld [vmem:[#allocation5 + $0x30] sm:$0xff]
      %v362 = vld [vmem:[#allocation5 + $0x38] sm:$0xff]
      %v363 = vld [vmem:[%s2] sm:$0xff]
      %v364 = vld [vmem:[%s2 + $0x8] sm:$0xff]
      %366 = vset.pattern.permute.xlu0 0
      %367 = vperm.xlu0 %366, %v363
      %v368 = vpop.permute.xlu0 %367
      %371 = vset.pattern.permute.xlu0 0
      %372 = vperm.xlu0 %371, %v364
      %v373 = vpop.permute.xlu0 %372
      %v375 = vadd.f32 %v355, %v368
      %v376 = vadd.f32 %v356, %v368
      %v377 = vadd.f32 %v357, %v368
      %v378 = vadd.f32 %v358, %v368
      %v379 = vadd.f32 %v359, %v373
      %v380 = vadd.f32 %v360, %v373
      %v381 = vadd.f32 %v361, %v373
      %v382 = vadd.f32 %v362, %v373
      %vm383 = vcmp.ge.f32.partialorder %v375, 0.0
      %vm384 = vcmp.ge.f32.partialorder %v376, 0.0
      %vm385 = vcmp.ge.f32.partialorder %v377, 0.0
      %vm386 = vcmp.ge.f32.partialorder %v378, 0.0
      %vm387 = vcmp.ge.f32.partialorder %v379, 0.0
      %vm388 = vcmp.ge.f32.partialorder %v380, 0.0
      %vm389 = vcmp.ge.f32.partialorder %v381, 0.0
      %vm390 = vcmp.ge.f32.partialorder %v382, 0.0
      %v391 = vmul.f32 %v375, 0.2
      %v392 = vmul.f32 %v376, 0.2
      %v393 = vmul.f32 %v377, 0.2
      %v394 = vmul.f32 %v378, 0.2
      %v395 = vmul.f32 %v379, 0.2
      %v396 = vmul.f32 %v380, 0.2
      %v397 = vmul.f32 %v381, 0.2
      %v398 = vmul.f32 %v382, 0.2
      %v399 = vsel %vm383, %v375, %v391
      %v400 = vsel %vm384, %v376, %v392
      %v401 = vsel %vm385, %v377, %v393
      %v402 = vsel %vm386, %v378, %v394
      %v403 = vsel %vm387, %v379, %v395
      %v404 = vsel %vm388, %v380, %v396
      %v405 = vsel %vm389, %v381, %v397
      %v406 = vsel %vm390, %v382, %v398
      %407 = vst [vmem:[#allocation5] sm:$0xff] %v399
      %408 = vst [vmem:[#allocation5 + $0x8] sm:$0xff] %v400
      %409 = vst [vmem:[#allocation5 + $0x10] sm:$0xff] %v401
      %410 = vst [vmem:[#allocation5 + $0x18] sm:$0xff] %v402
      %411 = vst [vmem:[#allocation5 + $0x20] sm:$0xff] %v403
      %412 = vst [vmem:[#allocation5 + $0x28] sm:$0xff] %v404
      %413 = vst [vmem:[#allocation5 + $0x30] sm:$0xff] %v405
      %414 = vst [vmem:[#allocation5 + $0x38] sm:$0xff] %v406
    $region25: #{tpu_custom_call.1} parent=1 // pred_fallthru
      _
    // Predicated region
    $region26: #{tpu_custom_call.1} parent=1 // pred_check
      _
    $region27: #{tpu_custom_call.1} parent=1 // pred_check_branch
      %416 = sbr.rel (0) target = $region29
    $region28: #{tpu_custom_call.1} parent=1 // pred_region
      %s418 = ssub.s32 1024, 1024
      %419 = vsyncadd [#allocation4], %s418
      %s420 = sshll.u32 [#allocation5], 4
      %s421 = int_to_ptr.vmem [resolvable:$true] %s420
      %426 = dma.vmem_to_hbm [thread:$0]  %s421, 1024, %s3, [#allocation4], 512, 512, 32
    $region29: #{tpu_custom_call.1} parent=1 // pred_fallthru
      _
    // Predicated region
    $region30: #{tpu_custom_call.1} parent=1 // pred_check
      _
    $region31: #{tpu_custom_call.1} parent=1 // pred_check_branch
      %428 = sbr.rel (0) target = $region33
    $region32: #{tpu_custom_call.1} parent=1 // pred_region
      %429 = dma.done [#allocation4], 1024
    $region33: #{tpu_custom_call.1} parent=1 // pred_fallthru
      _
    %430 = vsyncpa [#allocation3], 1
    %431 = vsyncpa [#allocation4], 1

</llo_original>
